<compile_context>
chip_gen: v6e
topology: v6e:2x2x1
jax: 0.10.0
libtpu: 0.0.40
codegen_flags: <defaults>
</compile_context>

<pallas_src>
import math

import jax
import jax.numpy as jnp
from jax.experimental import pallas as pl
from jax.experimental.pallas import tpu as pltpu

# Module hyperparameters (small, synthetic):
LETTER_BITS = 8
COLOR_BITS = 4
COLUMN_COUNT = 4
ROW_COUNT = 2
IN_DIM = (LETTER_BITS + COLOR_BITS) * COLUMN_COUNT * ROW_COUNT   # 96
HIDDEN = 50
H_PAD = 128                                                      # lane-dense hidden
OUT_DIM = LETTER_BITS * COLUMN_COUNT                             # 32

WEIGHT_ELEMS = IN_DIM * H_PAD + H_PAD * H_PAD + H_PAD * OUT_DIM


def _cdiv(a, b):
    return -(-a // b)


def _round_up(x, m):
    return _cdiv(x, m) * m


def mlp_kernel(x_ref, w1_ref, b1_ref, w2_ref, b2_ref, w3_ref, b3_ref, o_ref):
    """One batch tile of the fused 3-layer MLP. bf16 operands, f32 accumulation."""
    x = x_ref[...]                                               # (TB, IN_DIM) bf16
    h1 = jnp.dot(x, w1_ref[...], preferred_element_type=jnp.float32) + b1_ref[...]
    h1 = jnp.maximum(h1, 0.0)
    h2 = jnp.dot(h1.astype(jnp.bfloat16), w2_ref[...],
                 preferred_element_type=jnp.float32) + b2_ref[...]
    h2 = jnp.maximum(h2, 0.0)
    logits = jnp.dot(h2.astype(jnp.bfloat16), w3_ref[...],
                     preferred_element_type=jnp.float32) + b3_ref[...]
    o_ref[...] = logits.astype(o_ref.dtype)                      # bf16 writeback


def _choose_tiling(B, tile_b, min_steps=2):
    """Pick (TB, steps) with TB a multiple of 8, pad waste < 8 rows per step,
    and >= min_steps grid steps whenever B permits (v7x megacore)."""
    steps = max(_cdiv(B, tile_b), min_steps)
    steps = min(steps, max(1, _cdiv(B, 8)))          # keep TB >= 8
    tb = _round_up(_cdiv(B, steps), 8)
    steps = max(1, _cdiv(B, tb))                      # shave unneeded steps
    return tb, steps


def _vmem_limit_bytes(tb):
    """Actual footprint with generous margin; capped under v7x's 64 MiB/TC."""
    need = (2 * tb * IN_DIM * 2          # double-buffered bf16 x tiles
            + 2 * tb * OUT_DIM * 2       # double-buffered bf16 out tiles
            + 2 * tb * H_PAD * 4         # f32 h1/h2 live intermediates
            + WEIGHT_ELEMS * 2           # bf16 weights (single-buffered)
            + (2 * H_PAD + OUT_DIM) * 4) # f32 biases
    return int(min(56 * 2**20, max(16 * 2**20, 3 * need)))


def _resident_spec(shape):
    """Constant-index (VMEM-resident) operand; single-buffered when supported."""
    idx = lambda i: (0, 0)
    try:
        return pl.BlockSpec(shape, idx, pipeline_mode=pl.Buffered(1))
    except (AttributeError, TypeError):
        return pl.BlockSpec(shape, idx)


def neural_network_forward(x, staged_params, *, tile_b=2048):
    """x: (B, IN_DIM) float array. Returns logits of shape (B, OUT_DIM) float32."""
    w1, b1, w2, b2, w3, b3 = staged_params
    B = x.shape[0]

    TB, steps = _choose_tiling(B, tile_b)
    B_pad = TB * steps

    xb = x.astype(jnp.bfloat16)
    if B_pad != B:
        xb = jnp.pad(xb, ((0, B_pad - B), (0, 0)))

    x_spec = pl.BlockSpec((TB, IN_DIM), lambda i: (i, 0))
    o_spec = pl.BlockSpec((TB, OUT_DIM), lambda i: (i, 0))

    cost = pl.CostEstimate(
        flops=2 * B_pad * WEIGHT_ELEMS,
        transcendentals=0,
        bytes_accessed=(B_pad * IN_DIM * 2            # x (bf16) read
                        + B_pad * OUT_DIM * 2         # out (bf16) write
                        + WEIGHT_ELEMS * 2            # weights (bf16)
                        + (2 * H_PAD + OUT_DIM) * 4), # biases (f32)
    )

    out = pl.pallas_call(
        mlp_kernel,
        out_shape=jax.ShapeDtypeStruct((B_pad, OUT_DIM), jnp.bfloat16),
        grid_spec=pltpu.PrefetchScalarGridSpec(
            num_scalar_prefetch=0,
            grid=(steps,),
            in_specs=[
                x_spec,
                _resident_spec(w1.shape), _resident_spec(b1.shape),
                _resident_spec(w2.shape), _resident_spec(b2.shape),
                _resident_spec(w3.shape), _resident_spec(b3.shape),
            ],
            out_specs=o_spec,
        ),
        compiler_params=pltpu.CompilerParams(
            dimension_semantics=("parallel",),        # megacore split on v7x
            vmem_limit_bytes=_vmem_limit_bytes(TB),
        ),
        cost_estimate=cost,
    )(xb, w1, b1, w2, b2, w3, b3)

    return out[:B].astype(jnp.float32)


def init_params(key):
    """Deterministic init mimicking nn.Linear's default (uniform +/- 1/sqrt(fan_in)).
    Weights stored as (in_features, out_features), f32, unpadded."""
    def linear(key, fan_in, fan_out):
        kw, kb = jax.random.split(key)
        bound = 1.0 / math.sqrt(fan_in)
        w = jax.random.uniform(kw, (fan_in, fan_out), jnp.float32, -bound, bound)
        b = jax.random.uniform(kb, (1, fan_out), jnp.float32, -bound, bound)
        return w, b

    k1, k2, k3 = jax.random.split(key, 3)
    w1, b1 = linear(k1, IN_DIM, HIDDEN)
    w2, b2 = linear(k2, HIDDEN, HIDDEN)
    w3, b3 = linear(k3, HIDDEN, OUT_DIM)
    return (w1, b1, w2, b2, w3, b3)


def stage_params(params):
    """One-time staging: zero-pad hidden dims to H_PAD (lane-dense) and cast
    weights to bf16 (biases stay f32). Note: bf16 staging is a deliberate
    numerics trade-off vs the f32 PyTorch model."""
    w1, b1, w2, b2, w3, b3 = params

    def pad_to(a, shape):
        pads = [(0, t - s) for s, t in zip(a.shape, shape)]
        return jnp.pad(a, pads)

    w1p = pad_to(w1, (IN_DIM, H_PAD)).astype(jnp.bfloat16)
    b1p = pad_to(b1, (1, H_PAD)).astype(jnp.float32)
    w2p = pad_to(w2, (H_PAD, H_PAD)).astype(jnp.bfloat16)
    b2p = pad_to(b2, (1, H_PAD)).astype(jnp.float32)
    w3p = pad_to(w3, (H_PAD, OUT_DIM)).astype(jnp.bfloat16)
    b3p = b3.astype(jnp.float32)
    return (w1p, b1p, w2p, b2p, w3p, b3p)


def reference_forward(x, staged_params):
    """Pure-JAX reference using the identical dtype pipeline as the kernel
    (bf16 operands, f32 accumulation, bf16 output rounding)."""
    w1, b1, w2, b2, w3, b3 = staged_params
    xb = x.astype(jnp.bfloat16)
    h1 = jnp.maximum(jnp.dot(xb, w1, preferred_element_type=jnp.float32) + b1, 0.0)
    h2 = jnp.maximum(
        jnp.dot(h1.astype(jnp.bfloat16), w2, preferred_element_type=jnp.float32) + b2,
        0.0)
    logits = jnp.dot(h2.astype(jnp.bfloat16), w3,
                     preferred_element_type=jnp.float32) + b3
    return logits.astype(jnp.bfloat16).astype(jnp.float32)


if __name__ == "__main__":
    key = jax.random.PRNGKey(0)
    kx, kp = jax.random.split(key)

    # Small deterministic example: B=300 with the default tile policy gives a
    # 2-step grid (TB=152) and a 4-row padded tail, exercising both the
    # multi-step path and the tail handling.
    B = 300
    x = jax.random.normal(kx, (B, IN_DIM), jnp.float32)
    params = init_params(kp)
    staged = stage_params(params)

    out = neural_network_forward(x, staged)
    out = jax.block_until_ready(out)

    ref = reference_forward(x, staged)
    assert out.shape == (B, OUT_DIM)
    assert jnp.allclose(out, ref, atol=2e-2, rtol=2e-2), "mismatch vs reference"

    print("KERNEL_OK")
</pallas_src>

<mosaic_0001>
module attributes {stable_mosaic.version = 11 : i64} {
  func.func @mlp_kernel(%arg0: i32, %arg1: memref<152x96xbf16, #tpu.memory_space<vmem>>, %arg2: memref<96x128xbf16, #tpu.memory_space<vmem>>, %arg3: memref<1x128xf32, #tpu.memory_space<vmem>>, %arg4: memref<128x128xbf16, #tpu.memory_space<vmem>>, %arg5: memref<1x128xf32, #tpu.memory_space<vmem>>, %arg6: memref<128x32xbf16, #tpu.memory_space<vmem>>, %arg7: memref<1x32xf32, #tpu.memory_space<vmem>>, %arg8: memref<152x32xbf16, #tpu.memory_space<vmem>>) attributes {dimension_semantics = [#tpu.dimension_semantics<parallel>], iteration_bounds = array<i64: 2>, scalar_prefetch = 0 : i64, scratch_operands = 0 : i64, tpu.core_type = #tpu.core_type<tc>, window_params = [{transform_indices = @transform_0, window_bounds = array<i64: 152, 96>}, {pipeline_mode = #tpu.pipeline_mode<synchronous>, transform_indices = @transform_1, window_bounds = array<i64: 96, 128>}, {pipeline_mode = #tpu.pipeline_mode<synchronous>, transform_indices = @transform_2, window_bounds = array<i64: 1, 128>}, {pipeline_mode = #tpu.pipeline_mode<synchronous>, transform_indices = @transform_3, window_bounds = array<i64: 128, 128>}, {pipeline_mode = #tpu.pipeline_mode<synchronous>, transform_indices = @transform_4, window_bounds = array<i64: 1, 128>}, {pipeline_mode = #tpu.pipeline_mode<synchronous>, transform_indices = @transform_5, window_bounds = array<i64: 128, 32>}, {pipeline_mode = #tpu.pipeline_mode<synchronous>, transform_indices = @transform_6, window_bounds = array<i64: 1, 32>}, {transform_indices = @transform_7, window_bounds = array<i64: 152, 32>}]} {
    %c0 = arith.constant 0 : index
    %c0_0 = arith.constant 0 : index
    %0 = vector.load %arg1[%c0, %c0_0] : memref<152x96xbf16, #tpu.memory_space<vmem>>, vector<152x96xbf16>
    %c0_1 = arith.constant 0 : index
    %c0_2 = arith.constant 0 : index
    %1 = vector.load %arg2[%c0_1, %c0_2] : memref<96x128xbf16, #tpu.memory_space<vmem>>, vector<96x128xbf16>
    %cst = arith.constant dense<0.000000e+00> : vector<152x128xf32>
    %2 = tpu.matmul %0, %1, %cst {dimension_numbers = #tpu.dot_dimension_numbers<[1], [0], [0], [1], [0, 0, 1, 1], [], []>} : vector<152x96xbf16>, vector<96x128xbf16>, vector<152x128xf32> -> vector<152x128xf32>
    %c0_3 = arith.constant 0 : index
    %c0_4 = arith.constant 0 : index
    %3 = vector.load %arg3[%c0_3, %c0_4] : memref<1x128xf32, #tpu.memory_space<vmem>>, vector<1x128xf32>
    %4 = vector.broadcast %3 : vector<1x128xf32> to vector<152x128xf32>
    %5 = arith.addf %2, %4 : vector<152x128xf32>
    %cst_5 = arith.constant 0.000000e+00 : f32
    %6 = vector.broadcast %cst_5 : f32 to vector<152x128xf32>
    %7 = arith.maximumf %5, %6 : vector<152x128xf32>
    %8 = arith.truncf %7 : vector<152x128xf32> to vector<152x128xbf16>
    %c0_6 = arith.constant 0 : index
    %c0_7 = arith.constant 0 : index
    %9 = vector.load %arg4[%c0_6, %c0_7] : memref<128x128xbf16, #tpu.memory_space<vmem>>, vector<128x128xbf16>
    %cst_8 = arith.constant dense<0.000000e+00> : vector<152x128xf32>
    %10 = tpu.matmul %8, %9, %cst_8 {dimension_numbers = #tpu.dot_dimension_numbers<[1], [0], [0], [1], [0, 0, 1, 1], [], []>} : vector<152x128xbf16>, vector<128x128xbf16>, vector<152x128xf32> -> vector<152x128xf32>
    %c0_9 = arith.constant 0 : index
    %c0_10 = arith.constant 0 : index
    %11 = vector.load %arg5[%c0_9, %c0_10] : memref<1x128xf32, #tpu.memory_space<vmem>>, vector<1x128xf32>
    %12 = vector.broadcast %11 : vector<1x128xf32> to vector<152x128xf32>
    %13 = arith.addf %10, %12 : vector<152x128xf32>
    %cst_11 = arith.constant 0.000000e+00 : f32
    %14 = vector.broadcast %cst_11 : f32 to vector<152x128xf32>
    %15 = arith.maximumf %13, %14 : vector<152x128xf32>
    %16 = arith.truncf %15 : vector<152x128xf32> to vector<152x128xbf16>
    %c0_12 = arith.constant 0 : index
    %c0_13 = arith.constant 0 : index
    %17 = vector.load %arg6[%c0_12, %c0_13] : memref<128x32xbf16, #tpu.memory_space<vmem>>, vector<128x32xbf16>
    %cst_14 = arith.constant dense<0.000000e+00> : vector<152x32xf32>
    %18 = tpu.matmul %16, %17, %cst_14 {dimension_numbers = #tpu.dot_dimension_numbers<[1], [0], [0], [1], [0, 0, 1, 1], [], []>} : vector<152x128xbf16>, vector<128x32xbf16>, vector<152x32xf32> -> vector<152x32xf32>
    %c0_15 = arith.constant 0 : index
    %c0_16 = arith.constant 0 : index
    %19 = vector.load %arg7[%c0_15, %c0_16] : memref<1x32xf32, #tpu.memory_space<vmem>>, vector<1x32xf32>
    %20 = vector.broadcast %19 : vector<1x32xf32> to vector<152x32xf32>
    %21 = arith.addf %18, %20 : vector<152x32xf32>
    %22 = arith.truncf %21 : vector<152x32xf32> to vector<152x32xbf16>
    %c0_17 = arith.constant 0 : index
    %c0_18 = arith.constant 0 : index
    %23 = vector.load %arg8[%c0_17, %c0_18] : memref<152x32xbf16, #tpu.memory_space<vmem>>, vector<152x32xbf16>
    tpu.vector_store %arg8[%c0_17, %c0_18], %22 {strides = array<i32>} : memref<152x32xbf16, #tpu.memory_space<vmem>>, vector<152x32xbf16>,
    return
  }
  func.func @transform_0(%arg0: i32) -> (i32, i32) {
    %c0_i32 = arith.constant 0 : i32
    %c0_i32_0 = arith.constant 0 : i32
    return %arg0, %c0_i32 : i32, i32
  }
  func.func @transform_1(%arg0: i32) -> (i32, i32) {
    %c0_i32 = arith.constant 0 : i32
    %c0_i32_0 = arith.constant 0 : i32
    %c0_i32_1 = arith.constant 0 : i32
    return %c0_i32, %c0_i32_0 : i32, i32
  }
  func.func @transform_2(%arg0: i32) -> (i32, i32) {
    %c0_i32 = arith.constant 0 : i32
    %c0_i32_0 = arith.constant 0 : i32
    %c0_i32_1 = arith.constant 0 : i32
    return %c0_i32, %c0_i32_0 : i32, i32
  }
  func.func @transform_3(%arg0: i32) -> (i32, i32) {
    %c0_i32 = arith.constant 0 : i32
    %c0_i32_0 = arith.constant 0 : i32
    %c0_i32_1 = arith.constant 0 : i32
    return %c0_i32, %c0_i32_0 : i32, i32
  }
  func.func @transform_4(%arg0: i32) -> (i32, i32) {
    %c0_i32 = arith.constant 0 : i32
    %c0_i32_0 = arith.constant 0 : i32
    %c0_i32_1 = arith.constant 0 : i32
    return %c0_i32, %c0_i32_0 : i32, i32
  }
  func.func @transform_5(%arg0: i32) -> (i32, i32) {
    %c0_i32 = arith.constant 0 : i32
    %c0_i32_0 = arith.constant 0 : i32
    %c0_i32_1 = arith.constant 0 : i32
    return %c0_i32, %c0_i32_0 : i32, i32
  }
  func.func @transform_6(%arg0: i32) -> (i32, i32) {
    %c0_i32 = arith.constant 0 : i32
    %c0_i32_0 = arith.constant 0 : i32
    %c0_i32_1 = arith.constant 0 : i32
    return %c0_i32, %c0_i32_0 : i32, i32
  }
  func.func @transform_7(%arg0: i32) -> (i32, i32) {
    %c0_i32 = arith.constant 0 : i32
    %c0_i32_0 = arith.constant 0 : i32
    return %arg0, %c0_i32 : i32, i32
  }
}

</mosaic_0001>

<llo_original>
// kernel: tpu_custom_call.1
$region0: #{tpu_custom_call.1}
  #allocation0 [shape = 'u32[]', space=smem, size = 0x4, offset = 0x4, fixed_abs, tag = 'smem constant byte address 0x4 - core index']
  #allocation1 [shape = 'u32[144,128]{1,0:T(1,128)}', space=vmem, size = 0x12000, scoped, tag = 'internal scratch']
  %s0 = inlined_call_operand.vmem [shape: bf16[304,96], index: 0, kind: input, shape index: {}]
  %s1 = inlined_call_operand.vmem [shape: bf16[96,128], index: 1, kind: input, shape index: {}]
  %s2 = inlined_call_operand.vmem [shape: f32[1,128], index: 2, kind: input, shape index: {}]
  %s3 = inlined_call_operand.vmem [shape: bf16[128,128], index: 3, kind: input, shape index: {}]
  %s4 = inlined_call_operand.vmem [shape: f32[1,128], index: 4, kind: input, shape index: {}]
  %s5 = inlined_call_operand.vmem [shape: bf16[128,32], index: 5, kind: input, shape index: {}]
  %s6 = inlined_call_operand.vmem [shape: f32[1,32], index: 6, kind: input, shape index: {}]
  %s7 = inlined_call_operand.vmem [shape: bf16[304,32], index: 7, kind: output, shape index: {}]
  %s8 = sld [smem:[#allocation0]]
  $region61: #{tpu_custom_call.1} parent=0
    _
  %s10 = ssub.s32 1, %s8
  %s11 = scalar_select 0, %s10, %s8
  loop: start=0, step=1, limit=4
  $region2: #{tpu_custom_call.1} parent=0 // loop_pre_header
    _
  $region3: #{tpu_custom_call.1} parent=0 // loop_header
    %s13 = sphi 0, %s17
    %p14 = scmp.ge.s32.totalorder %s13, 4
    %s23 = sphi 0, %s25
    %s26 = sphi 0, %s23
    %s27 = sphi 0, %s26
    %s43 = sphi 0, %s27
    %s47 = sphi 0, %s47
    %s49 = sphi 0, %s47
    %s50 = sphi 0, %s49
    %s64 = sphi 0, %s50
    %s68 = sphi 0, %s68
    %s70 = sphi 0, %s68
    %s71 = sphi 0, %s70
    %s85 = sphi 0, %s71
    %s89 = sphi 0, %s89
    %s91 = sphi 0, %s89
    %s92 = sphi 0, %s91
    %s106 = sphi 0, %s92
    %s110 = sphi 0, %s110
    %s112 = sphi 0, %s110
    %s113 = sphi 0, %s112
    %s127 = sphi 0, %s113
    %s131 = sphi 0, %s131
    %s133 = sphi 0, %s131
    %s134 = sphi 0, %s133
    %s148 = sphi 0, %s134
    %s152 = sphi 0, %s152
    %s154 = sphi 0, %s152
    %s155 = sphi 0, %s154
    %s169 = sphi 0, %s155
    %s175 = sphi 0, %s177
    %s178 = sphi 0, %s175
    %s179 = sphi 0, %s178
    %s195 = sphi 0, %s179
  $region4: #{tpu_custom_call.1} parent=0 // loop_header_branch
    %16 = sbr.rel (%p14) target = $region8
  $region5: #{tpu_custom_call.1} parent=0 // loop_body
    %s18 = ssub.s32 %s13, 1
    %s19 = ssub.s32 %s13, 2
    %s20 = sadd.s32 %s13, 1
    %s21 = ssub.s32 %s13, %s20
    %p22 = scmp.eq.s32.totalorder %s21, 0
    %s24 = sadd.s32 %s23, 1
    %s25 = scalar_select %p22, %s23, %s24
    %p28 = pneg %p22
    %p29 = scmp.eq.s32.totalorder %s13, 1
    %p30 = por %p28, %p29
    %p31 = scmp.ne.s32.totalorder %s23, %s26
    %p32 = scmp.eq.s32.totalorder %s13, 0
    %p33 = por %p31, %p32
    %p34 = scmp.ne.s32.totalorder %s23, %s26
    %p35 = scmp.eq.s32.totalorder %s18, 1
    %p36 = por %p34, %p35
    %p37 = scmp.ne.s32.totalorder %s26, %s27
    %p38 = scmp.eq.s32.totalorder %s18, 0
    %p39 = por %p37, %p38
    %p40 = scmp.ne.s32.totalorder %s26, %s27
    %p41 = scmp.eq.s32.totalorder %s19, 1
    %p42 = por %p40, %p41
    %p44 = scmp.ne.s32.totalorder %s27, %s43
    %p45 = scmp.eq.s32.totalorder %s19, 0
    %p46 = por %p44, %p45
    %s48 = sadd.s32 %s47, 1
    %p51 = scmp.eq.s32.totalorder %s13, 1
    %p52 = scmp.ne.s32.totalorder %s47, %s49
    %p53 = scmp.eq.s32.totalorder %s13, 0
    %p54 = por %p52, %p53
    %p55 = scmp.ne.s32.totalorder %s47, %s49
    %p56 = scmp.eq.s32.totalorder %s18, 1
    %p57 = por %p55, %p56
    %p58 = scmp.ne.s32.totalorder %s49, %s50
    %p59 = scmp.eq.s32.totalorder %s18, 0
    %p60 = por %p58, %p59
    %p61 = scmp.ne.s32.totalorder %s49, %s50
    %p62 = scmp.eq.s32.totalorder %s19, 1
    %p63 = por %p61, %p62
    %p65 = scmp.ne.s32.totalorder %s50, %s64
    %p66 = scmp.eq.s32.totalorder %s19, 0
    %p67 = por %p65, %p66
    %s69 = sadd.s32 %s68, 1
    %p72 = scmp.eq.s32.totalorder %s13, 1
    %p73 = scmp.ne.s32.totalorder %s68, %s70
    %p74 = scmp.eq.s32.totalorder %s13, 0
    %p75 = por %p73, %p74
    %p76 = scmp.ne.s32.totalorder %s68, %s70
    %p77 = scmp.eq.s32.totalorder %s18, 1
    %p78 = por %p76, %p77
    %p79 = scmp.ne.s32.totalorder %s70, %s71
    %p80 = scmp.eq.s32.totalorder %s18, 0
    %p81 = por %p79, %p80
    %p82 = scmp.ne.s32.totalorder %s70, %s71
    %p83 = scmp.eq.s32.totalorder %s19, 1
    %p84 = por %p82, %p83
    %p86 = scmp.ne.s32.totalorder %s71, %s85
    %p87 = scmp.eq.s32.totalorder %s19, 0
    %p88 = por %p86, %p87
    %s90 = sadd.s32 %s89, 1
    %p93 = scmp.eq.s32.totalorder %s13, 1
    %p94 = scmp.ne.s32.totalorder %s89, %s91
    %p95 = scmp.eq.s32.totalorder %s13, 0
    %p96 = por %p94, %p95
    %p97 = scmp.ne.s32.totalorder %s89, %s91
    %p98 = scmp.eq.s32.totalorder %s18, 1
    %p99 = por %p97, %p98
    %p100 = scmp.ne.s32.totalorder %s91, %s92
    %p101 = scmp.eq.s32.totalorder %s18, 0
    %p102 = por %p100, %p101
    %p103 = scmp.ne.s32.totalorder %s91, %s92
    %p104 = scmp.eq.s32.totalorder %s19, 1
    %p105 = por %p103, %p104
    %p107 = scmp.ne.s32.totalorder %s92, %s106
    %p108 = scmp.eq.s32.totalorder %s19, 0
    %p109 = por %p107, %p108
    %s111 = sadd.s32 %s110, 1
    %p114 = scmp.eq.s32.totalorder %s13, 1
    %p115 = scmp.ne.s32.totalorder %s110, %s112
    %p116 = scmp.eq.s32.totalorder %s13, 0
    %p117 = por %p115, %p116
    %p118 = scmp.ne.s32.totalorder %s110, %s112
    %p119 = scmp.eq.s32.totalorder %s18, 1
    %p120 = por %p118, %p119
    %p121 = scmp.ne.s32.totalorder %s112, %s113
    %p122 = scmp.eq.s32.totalorder %s18, 0
    %p123 = por %p121, %p122
    %p124 = scmp.ne.s32.totalorder %s112, %s113
    %p125 = scmp.eq.s32.totalorder %s19, 1
    %p126 = por %p124, %p125
    %p128 = scmp.ne.s32.totalorder %s113, %s127
    %p129 = scmp.eq.s32.totalorder %s19, 0
    %p130 = por %p128, %p129
    %s132 = sadd.s32 %s131, 1
    %p135 = scmp.eq.s32.totalorder %s13, 1
    %p136 = scmp.ne.s32.totalorder %s131, %s133
    %p137 = scmp.eq.s32.totalorder %s13, 0
    %p138 = por %p136, %p137
    %p139 = scmp.ne.s32.totalorder %s131, %s133
    %p140 = scmp.eq.s32.totalorder %s18, 1
    %p141 = por %p139, %p140
    %p142 = scmp.ne.s32.totalorder %s133, %s134
    %p143 = scmp.eq.s32.totalorder %s18, 0
    %p144 = por %p142, %p143
    %p145 = scmp.ne.s32.totalorder %s133, %s134
    %p146 = scmp.eq.s32.totalorder %s19, 1
    %p147 = por %p145, %p146
    %p149 = scmp.ne.s32.totalorder %s134, %s148
    %p150 = scmp.eq.s32.totalorder %s19, 0
    %p151 = por %p149, %p150
    %s153 = sadd.s32 %s152, 1
    %p156 = scmp.eq.s32.totalorder %s13, 1
    %p157 = scmp.ne.s32.totalorder %s152, %s154
    %p158 = scmp.eq.s32.totalorder %s13, 0
    %p159 = por %p157, %p158
    %p160 = scmp.ne.s32.totalorder %s152, %s154
    %p161 = scmp.eq.s32.totalorder %s18, 1
    %p162 = por %p160, %p161
    %p163 = scmp.ne.s32.totalorder %s154, %s155
    %p164 = scmp.eq.s32.totalorder %s18, 0
    %p165 = por %p163, %p164
    %p166 = scmp.ne.s32.totalorder %s154, %s155
    %p167 = scmp.eq.s32.totalorder %s19, 1
    %p168 = por %p166, %p167
    %p170 = scmp.ne.s32.totalorder %s155, %s169
    %p171 = scmp.eq.s32.totalorder %s19, 0
    %p172 = por %p170, %p171
    %s173 = ssub.s32 %s13, %s20
    %p174 = scmp.eq.s32.totalorder %s173, 0
    %s176 = sadd.s32 %s175, 1
    %s177 = scalar_select %p174, %s175, %s176
    %p180 = pneg %p174
    %p181 = scmp.eq.s32.totalorder %s13, 1
    %p182 = por %p180, %p181
    %p183 = scmp.ne.s32.totalorder %s175, %s178
    %p184 = scmp.eq.s32.totalorder %s13, 0
    %p185 = por %p183, %p184
    %p186 = scmp.ne.s32.totalorder %s175, %s178
    %p187 = scmp.eq.s32.totalorder %s18, 1
    %p188 = por %p186, %p187
    %p189 = scmp.ne.s32.totalorder %s178, %s179
    %p190 = scmp.eq.s32.totalorder %s18, 0
    %p191 = por %p189, %p190
    %p192 = scmp.ne.s32.totalorder %s178, %s179
    %p193 = scmp.eq.s32.totalorder %s19, 1
    %p194 = por %p192, %p193
    %p196 = scmp.ne.s32.totalorder %s179, %s195
    %p197 = scmp.eq.s32.totalorder %s19, 0
    %p198 = por %p196, %p197
    %p199 = scmp.le.s32.totalorder 1, %s13
    %p200 = scmp.lt.s32.totalorder %s13, 3
    %p201 = pnand %p199, %p200
    %p202 = pneg %p201
    // Predicated region
    $region9: #{tpu_custom_call.1} parent=5 // pred_check
      _
    $region10: #{tpu_custom_call.1} parent=5 // pred_check_branch
      %204 = sbr.rel (%p201) target = $region12
    $region11: #{tpu_custom_call.1} parent=5 // pred_region
      %s205 = ssub.s32 %s13, 1
      // Predicated region
      $region13: #{tpu_custom_call.1} parent=11 // pred_check
        %p206 = pneg %p60
      $region14: #{tpu_custom_call.1} parent=11 // pred_check_branch
        %208 = sbr.rel (%p206) target = $region16
      $region15: #{tpu_custom_call.1} parent=11 // pred_region
        _
      $region16: #{tpu_custom_call.1} parent=11 // pred_fallthru
        _
      // Predicated region
      $region17: #{tpu_custom_call.1} parent=11 // pred_check
        %p209 = pneg %p81
      $region18: #{tpu_custom_call.1} parent=11 // pred_check_branch
        %211 = sbr.rel (%p209) target = $region20
      $region19: #{tpu_custom_call.1} parent=11 // pred_region
        _
      $region20: #{tpu_custom_call.1} parent=11 // pred_fallthru
        _
      // Predicated region
      $region21: #{tpu_custom_call.1} parent=11 // pred_check
        %p212 = pneg %p102
      $region22: #{tpu_custom_call.1} parent=11 // pred_check_branch
        %214 = sbr.rel (%p212) target = $region24
      $region23: #{tpu_custom_call.1} parent=11 // pred_region
        _
      $region24: #{tpu_custom_call.1} parent=11 // pred_fallthru
        _
      // Predicated region
      $region25: #{tpu_custom_call.1} parent=11 // pred_check
        %p215 = pneg %p123
      $region26: #{tpu_custom_call.1} parent=11 // pred_check_branch
        %217 = sbr.rel (%p215) target = $region28
      $region27: #{tpu_custom_call.1} parent=11 // pred_region
        _
      $region28: #{tpu_custom_call.1} parent=11 // pred_fallthru
        _
      // Predicated region
      $region29: #{tpu_custom_call.1} parent=11 // pred_check
        %p218 = pneg %p144
      $region30: #{tpu_custom_call.1} parent=11 // pred_check_branch
        %220 = sbr.rel (%p218) target = $region32
      $region31: #{tpu_custom_call.1} parent=11 // pred_region
        _
      $region32: #{tpu_custom_call.1} parent=11 // pred_fallthru
        _
      // Predicated region
      $region33: #{tpu_custom_call.1} parent=11 // pred_check
        %p221 = pneg %p165
      $region34: #{tpu_custom_call.1} parent=11 // pred_check_branch
        %223 = sbr.rel (%p221) target = $region36
      $region35: #{tpu_custom_call.1} parent=11 // pred_region
        _
      $region36: #{tpu_custom_call.1} parent=11 // pred_fallthru
        _
    $region12: #{tpu_custom_call.1} parent=5 // pred_fallthru
      _
    %p224 = scmp.lt.s32.totalorder %s13, 2
    // Predicated region
    $region37: #{tpu_custom_call.1} parent=5 // pred_check
      %p225 = pneg %p224
    $region38: #{tpu_custom_call.1} parent=5 // pred_check_branch
      %227 = sbr.rel (%p225) target = $region40
    $region39: #{tpu_custom_call.1} parent=5 // pred_region
      // Predicated region
      $region41: #{tpu_custom_call.1} parent=39 // pred_check
        %p228 = pneg %p33
      $region42: #{tpu_custom_call.1} parent=39 // pred_check_branch
        %230 = sbr.rel (%p228) target = $region44
      $region43: #{tpu_custom_call.1} parent=39 // pred_region
        %s231 = smul.u32 19, %s13
        %p232 = scmp.lt.s32.totalorder %s231, 37
        %s233 = scalar_select %p232, %s231, 37
        %s234 = smul.addr %s233, 4
        %s235 = scalar_lea.vmem %s0, %s234
        %s236 = smul.u32 19, %s13
      $region44: #{tpu_custom_call.1} parent=39 // pred_fallthru
        _
    $region40: #{tpu_custom_call.1} parent=5 // pred_fallthru
      _
    %p237 = scmp.le.s32.totalorder 1, %s13
    %p238 = scmp.lt.s32.totalorder %s13, 3
    %p239 = pnand %p237, %p238
    %p240 = pneg %p239
    // Predicated region
    $region45: #{tpu_custom_call.1} parent=5 // pred_check
      _
    $region46: #{tpu_custom_call.1} parent=5 // pred_check_branch
      %242 = sbr.rel (%p239) target = $region48
    $region47: #{tpu_custom_call.1} parent=5 // pred_region
      %s243 = ssub.s32 %s13, 1
      %s244 = smul.u32 19, %s18
      %p245 = scmp.lt.s32.totalorder %s244, 37
      %s246 = scalar_select %p245, %s244, 37
      %s247 = smul.addr %s246, 4
      %s248 = scalar_lea.vmem %s0, %s247
      %p249 = pneg %p39
      %p250 = pneg %p36
      %p251 = pneg %p60
      %p252 = pneg %p57
      %p253 = pneg %p81
      %p254 = pneg %p78
      %p255 = pneg %p102
      %p256 = pneg %p99
      %p257 = pneg %p123
      %p258 = pneg %p120
      %p259 = pneg %p144
      %p260 = pneg %p141
      %p261 = pneg %p165
      %p262 = pneg %p162
      %p263 = pneg %p191
      %p264 = pneg %p188
      %s265 = smul.u32 19, %s18
      %p266 = scmp.lt.s32.totalorder %s265, 37
      %s267 = scalar_select %p266, %s265, 37
      %s268 = smul.addr %s267, 4
      %s269 = scalar_lea.vmem %s7, %s268
      %s270 = smul.u32 19, %s18
      %p271 = scmp.lt.s32.totalorder %s270, 37
      %s272 = scalar_select %p271, %s270, 37
      %s273 = smul.addr %s272, 4
      %s274 = scalar_lea.vmem %s0, %s273
      %s275 = smul.u32 19, %s18
      %s276 = smul.u32 19, %s18
      %p277 = scmp.lt.s32.totalorder %s276, 37
      %s278 = scalar_select %p277, %s276, 37
      %s279 = smul.addr %s278, 4
      %s280 = scalar_lea.vmem %s7, %s279
      %s281 = smul.u32 19, %s18
      %v283 = vld [vmem:[%s274] sm:$0xf]
      %v284 = vld [vmem:[%s274 + $0x4] sm:$0xf]
      %v285 = vld [vmem:[%s274 + $0x8] sm:$0xf]
      %v286 = vld [vmem:[%s274 + $0xc] sm:$0xf]
      %v287 = vld [vmem:[%s274 + $0x10] sm:$0xf]
      %v288 = vld [vmem:[%s274 + $0x14] sm:$0xf]
      %v289 = vld [vmem:[%s274 + $0x18] sm:$0xf]
      %v290 = vld [vmem:[%s274 + $0x1c] sm:$0xf]
      %v291 = vld [vmem:[%s274 + $0x20] sm:$0xf]
      %v292 = vld [vmem:[%s274 + $0x24] sm:$0xf]
      %v293 = vld [vmem:[%s274 + $0x28] sm:$0xf]
      %v294 = vld [vmem:[%s274 + $0x2c] sm:$0xf]
      %v295 = vld [vmem:[%s274 + $0x30] sm:$0xf]
      %v296 = vld [vmem:[%s274 + $0x34] sm:$0xf]
      %v297 = vld [vmem:[%s274 + $0x38] sm:$0xf]
      %v298 = vld [vmem:[%s274 + $0x3c] sm:$0xf]
      %v299 = vld [vmem:[%s274 + $0x40] sm:$0xf]
      %v300 = vld [vmem:[%s274 + $0x44] sm:$0xf]
      %v301 = vld [vmem:[%s274 + $0x48] sm:$0xf]
      %v302 = vld [vmem:[%s1] sm:$0xf]
      %v303 = vld [vmem:[%s1 + $0x4] sm:$0xf]
      %v304 = vld [vmem:[%s1 + $0x8] sm:$0xf]
      %v305 = vld [vmem:[%s1 + $0xc] sm:$0xf]
      %v306 = vld [vmem:[%s1 + $0x10] sm:$0xf]
      %v307 = vld [vmem:[%s1 + $0x14] sm:$0xf]
      %v308 = vld [vmem:[%s1 + $0x18] sm:$0xf]
      %v309 = vld [vmem:[%s1 + $0x1c] sm:$0xf]
      %v310 = vld [vmem:[%s1 + $0x20] sm:$0xf]
      %v311 = vld [vmem:[%s1 + $0x24] sm:$0xf]
      %v312 = vld [vmem:[%s1 + $0x28] sm:$0xf]
      %v313 = vld [vmem:[%s1 + $0x2c] sm:$0xf]
      %v314 = vld [vmem:[%s2] sm:$0x1]
      %v316 = vlaneseq
      %v317 = vshrl.u32 %v316, 7
      %v318 = vsub.s32 0, %v317
      %v319 = vrot.slane %v314, %v318
      %v340 = vunpack.c.l.b16 %v283
      %v341 = vunpack.c.l.b16 %v284
      %v342 = vunpack.c.l.b16 %v285
      %v343 = vunpack.c.l.b16 %v286
      %v344 = vunpack.c.l.b16 %v287
      %v345 = vunpack.c.l.b16 %v288
      %v346 = vunpack.c.l.b16 %v289
      %v347 = vunpack.c.l.b16 %v290
      %v348 = vunpack.c.l.b16 %v291
      %v349 = vunpack.c.l.b16 %v292
      %v350 = vunpack.c.l.b16 %v293
      %v351 = vunpack.c.l.b16 %v294
      %v352 = vunpack.c.l.b16 %v295
      %v353 = vunpack.c.l.b16 %v296
      %v354 = vunpack.c.l.b16 %v297
      %v355 = vunpack.c.l.b16 %v298
      %v356 = vunpack.c.l.b16 %v299
      %v357 = vunpack.c.l.b16 %v300
      %v358 = vunpack.c.l.b16 %v301
      %v359 = vpack.c.b16 %v341, %v340
      %v360 = vpack.c.b16 %v343, %v342
      %v361 = vpack.c.b16 %v345, %v344
      %v362 = vpack.c.b16 %v347, %v346
      %v363 = vpack.c.b16 %v349, %v348
      %v364 = vpack.c.b16 %v351, %v350
      %v365 = vpack.c.b16 %v353, %v352
      %v366 = vpack.c.b16 %v355, %v354
      %v367 = vpack.c.b16 %v357, %v356
      %v368 = vpack.c.b16 %v358, %v358
      %v381 = vunpack.c.l.b16 %v302
      %v382 = vunpack.c.l.b16 %v303
      %v383 = vunpack.c.l.b16 %v304
      %v384 = vunpack.c.l.b16 %v305
      %v385 = vunpack.c.l.b16 %v306
      %v386 = vunpack.c.l.b16 %v307
      %v387 = vunpack.c.l.b16 %v308
      %v388 = vunpack.c.l.b16 %v309
      %v389 = vunpack.c.l.b16 %v310
      %v390 = vunpack.c.l.b16 %v311
      %v391 = vunpack.c.l.b16 %v312
      %v392 = vunpack.c.l.b16 %v313
      %v393 = vpack.c.b16 %v382, %v381
      %v394 = vpack.c.b16 %v384, %v383
      %v395 = vpack.c.b16 %v386, %v385
      %v396 = vpack.c.b16 %v388, %v387
      %v397 = vpack.c.b16 %v390, %v389
      %v398 = vpack.c.b16 %v392, %v391
      %vm405 = vcmask 785408
      %v407 = vsel %vm405, %v359, 0
      %v410 = vsel %vm405, %v360, 0
      %v413 = vsel %vm405, %v361, 0
      %v416 = vsel %vm405, %v362, 0
      %v419 = vsel %vm405, %v363, 0
      %v422 = vsel %vm405, %v364, 0
      %v425 = vsel %vm405, %v365, 0
      %v428 = vsel %vm405, %v366, 0
      %v431 = vsel %vm405, %v367, 0
      %v434 = vsel %vm405, %v368, 0
      %436 = vmatprep.subr.bf16.mxu0 0
      %437 = vmatpush1.bf16.msra.mxu0 0
      %438 = vmatprep.subr.bf16.mxu0 0
      %439 = vmatpush1.bf16.msra.mxu0 0
      %440 = vmatprep.subr.bf16.mxu0 0
      %441 = vmatpush1.bf16.msra.mxu0 %v398
      %442 = vmatprep.subr.bf16.mxu0 0
      %443 = vmatpush1.bf16.msra.mxu0 %v397
      %444 = vmatprep.subr.bf16.mxu0 0
      %445 = vmatpush1.bf16.msra.mxu0 %v396
      %446 = vmatprep.subr.bf16.mxu0 0
      %447 = vmatpush1.bf16.msra.mxu0 %v395
      %448 = vmatprep.subr.bf16.mxu0 0
      %449 = vmatpush1.bf16.msra.mxu0 %v394
      %450 = vmatprep.subr.bf16.mxu0 0
      %451 = vmatpush1.bf16.msra.mxu0 %v393
      %452 = vmatprep.subr.bf16.mxu0 0
      %453 = vmatpush2.bf16.msra.mxu0 0
      %454 = vmatprep.subr.bf16.mxu0 0
      %455 = vmatpush2.bf16.msra.mxu0 0
      %456 = vmatprep.subr.bf16.mxu0 0
      %457 = vmatpush2.bf16.msra.mxu0 0
      %458 = vmatprep.subr.bf16.mxu0 0
      %459 = vmatpush2.bf16.msra.mxu0 0
      %460 = vmatprep.subr.bf16.mxu0 0
      %461 = vmatpush2.bf16.msra.mxu0 0
      %462 = vmatprep.subr.bf16.mxu0 0
      %463 = vmatpush2.bf16.msra.mxu0 0
      %464 = vmatprep.subr.bf16.mxu0 0
      %465 = vmatpush2.bf16.msra.mxu0 0
      %466 = vmatprep.subr.bf16.mxu0 0
      %467 = vmatpush2.bf16.msra.mxu0 0
      %468 = vmatprep.mubr.bf16.mxu0 0
      %469 = vmatmul.mubr.bf16.gmra.mxu0 %v407
      %v470 = vpop.f32.mrf.mxu0
      %v471 = vadd.f32 %v319, %v470
      %v472 = vpop.f32.mrf.mxu0
      %v473 = vpop.f32.mrf.mxu0
      %v474 = vadd.f32 %v319, %v473
      %v475 = vpop.f32.mrf.mxu0
      %476 = vmatprep.mubr.bf16.mxu0 0
      %477 = vmatmul.mubr.bf16.gmra.mxu0 %v410
      %v478 = vpop.f32.mrf.mxu0
      %v479 = vadd.f32 %v319, %v478
      %v480 = vpop.f32.mrf.mxu0
      %v481 = vpop.f32.mrf.mxu0
      %v482 = vadd.f32 %v319, %v481
      %v483 = vpop.f32.mrf.mxu0
      %484 = vmatprep.mubr.bf16.mxu0 0
      %485 = vmatmul.mubr.bf16.gmra.mxu0 %v413
      %v486 = vpop.f32.mrf.mxu0
      %v487 = vadd.f32 %v319, %v486
      %v488 = vpop.f32.mrf.mxu0
      %v489 = vpop.f32.mrf.mxu0
      %v490 = vadd.f32 %v319, %v489
      %v491 = vpop.f32.mrf.mxu0
      %492 = vmatprep.mubr.bf16.mxu0 0
      %493 = vmatmul.mubr.bf16.gmra.mxu0 %v416
      %v494 = vpop.f32.mrf.mxu0
      %v495 = vadd.f32 %v319, %v494
      %v496 = vpop.f32.mrf.mxu0
      %v497 = vpop.f32.mrf.mxu0
      %v498 = vadd.f32 %v319, %v497
      %v499 = vpop.f32.mrf.mxu0
      %500 = vmatprep.mubr.bf16.mxu0 0
      %501 = vmatmul.mubr.bf16.gmra.mxu0 %v419
      %v502 = vpop.f32.mrf.mxu0
      %v503 = vadd.f32 %v319, %v502
      %v504 = vpop.f32.mrf.mxu0
      %v505 = vpop.f32.mrf.mxu0
      %v506 = vadd.f32 %v319, %v505
      %v507 = vpop.f32.mrf.mxu0
      %508 = vmatprep.mubr.bf16.mxu0 0
      %509 = vmatmul.mubr.bf16.gmra.mxu0 %v422
      %v510 = vpop.f32.mrf.mxu0
      %v511 = vadd.f32 %v319, %v510
      %v512 = vpop.f32.mrf.mxu0
      %v513 = vpop.f32.mrf.mxu0
      %v514 = vadd.f32 %v319, %v513
      %v515 = vpop.f32.mrf.mxu0
      %516 = vmatprep.mubr.bf16.mxu0 0
      %517 = vmatmul.mubr.bf16.gmra.mxu0 %v425
      %v518 = vpop.f32.mrf.mxu0
      %v519 = vadd.f32 %v319, %v518
      %v520 = vpop.f32.mrf.mxu0
      %v521 = vpop.f32.mrf.mxu0
      %v522 = vadd.f32 %v319, %v521
      %v523 = vpop.f32.mrf.mxu0
      %524 = vmatprep.mubr.bf16.mxu0 0
      %525 = vmatmul.mubr.bf16.gmra.mxu0 %v428
      %v526 = vpop.f32.mrf.mxu0
      %v527 = vadd.f32 %v319, %v526
      %v528 = vpop.f32.mrf.mxu0
      %v529 = vpop.f32.mrf.mxu0
      %v530 = vadd.f32 %v319, %v529
      %v531 = vpop.f32.mrf.mxu0
      %532 = vmatprep.mubr.bf16.mxu0 0
      %533 = vmatmul.mubr.bf16.gmra.mxu0 %v431
      %v534 = vpop.f32.mrf.mxu0
      %v535 = vadd.f32 %v319, %v534
      %v536 = vpop.f32.mrf.mxu0
      %v537 = vpop.f32.mrf.mxu0
      %v538 = vadd.f32 %v319, %v537
      %v539 = vpop.f32.mrf.mxu0
      %540 = vmatprep.mubr.bf16.mxu0 0
      %541 = vmatmul.mubr.bf16.gmra.mxu0 %v434
      %v542 = vpop.f32.mrf.mxu0
      %v543 = vadd.f32 %v319, %v542
      %v544 = vpop.f32.mrf.mxu0
      %v545 = vpop.f32.mrf.mxu0
      %v546 = vpop.f32.mrf.mxu0
      %547 = vdwg.mxu0
      %v548 = vmax.f32 %v471, 0.0
      %v549 = vmax.f32 %v474, 0.0
      %v550 = vmax.f32 %v479, 0.0
      %v551 = vmax.f32 %v482, 0.0
      %v552 = vmax.f32 %v487, 0.0
      %v553 = vmax.f32 %v490, 0.0
      %v554 = vmax.f32 %v495, 0.0
      %v555 = vmax.f32 %v498, 0.0
      %v556 = vmax.f32 %v503, 0.0
      %v557 = vmax.f32 %v506, 0.0
      %v558 = vmax.f32 %v511, 0.0
      %v559 = vmax.f32 %v514, 0.0
      %v560 = vmax.f32 %v519, 0.0
      %v561 = vmax.f32 %v522, 0.0
      %v562 = vmax.f32 %v527, 0.0
      %v563 = vmax.f32 %v530, 0.0
      %v564 = vmax.f32 %v535, 0.0
      %v565 = vmax.f32 %v538, 0.0
      %v566 = vmax.f32 %v543, 0.0
      %v567 = vpack.c.bf16 %v549, %v548
      %v568 = vpack.c.bf16 %v551, %v550
      %v569 = vpack.c.bf16 %v553, %v552
      %v570 = vpack.c.bf16 %v555, %v554
      %v571 = vpack.c.bf16 %v557, %v556
      %v572 = vpack.c.bf16 %v559, %v558
      %v573 = vpack.c.bf16 %v561, %v560
      %v574 = vpack.c.bf16 %v563, %v562
      %v575 = vpack.c.bf16 %v565, %v564
      %v576 = vpack.c.bf16 %v566, %v566
      %v577 = vld [vmem:[%s3] sm:$0xf]
      %v578 = vld [vmem:[%s3 + $0x4] sm:$0xf]
      %v579 = vld [vmem:[%s3 + $0x8] sm:$0xf]
      %v580 = vld [vmem:[%s3 + $0xc] sm:$0xf]
      %v581 = vld [vmem:[%s3 + $0x10] sm:$0xf]
      %v582 = vld [vmem:[%s3 + $0x14] sm:$0xf]
      %v583 = vld [vmem:[%s3 + $0x18] sm:$0xf]
      %v584 = vld [vmem:[%s3 + $0x1c] sm:$0xf]
      %v585 = vld [vmem:[%s3 + $0x20] sm:$0xf]
      %v586 = vld [vmem:[%s3 + $0x24] sm:$0xf]
      %v587 = vld [vmem:[%s3 + $0x28] sm:$0xf]
      %v588 = vld [vmem:[%s3 + $0x2c] sm:$0xf]
      %v589 = vld [vmem:[%s3 + $0x30] sm:$0xf]
      %v590 = vld [vmem:[%s3 + $0x34] sm:$0xf]
      %v591 = vld [vmem:[%s3 + $0x38] sm:$0xf]
      %v592 = vld [vmem:[%s3 + $0x3c] sm:$0xf]
      %v593 = vld [vmem:[%s4] sm:$0x1]
      %v595 = vlaneseq
      %v596 = vshrl.u32 %v595, 7
      %v597 = vsub.s32 0, %v596
      %v598 = vrot.slane %v593, %v597
      %v616 = vunpack.c.l.b16 %v577
      %v617 = vunpack.c.l.b16 %v578
      %v618 = vunpack.c.l.b16 %v579
      %v619 = vunpack.c.l.b16 %v580
      %v620 = vunpack.c.l.b16 %v581
      %v621 = vunpack.c.l.b16 %v582
      %v622 = vunpack.c.l.b16 %v583
      %v623 = vunpack.c.l.b16 %v584
      %v624 = vunpack.c.l.b16 %v585
      %v625 = vunpack.c.l.b16 %v586
      %v626 = vunpack.c.l.b16 %v587
      %v627 = vunpack.c.l.b16 %v588
      %v628 = vunpack.c.l.b16 %v589
      %v629 = vunpack.c.l.b16 %v590
      %v630 = vunpack.c.l.b16 %v591
      %v631 = vunpack.c.l.b16 %v592
      %v632 = vpack.c.b16 %v617, %v616
      %v633 = vpack.c.b16 %v619, %v618
      %v634 = vpack.c.b16 %v621, %v620
      %v635 = vpack.c.b16 %v623, %v622
      %v636 = vpack.c.b16 %v625, %v624
      %v637 = vpack.c.b16 %v627, %v626
      %v638 = vpack.c.b16 %v629, %v628
      %v639 = vpack.c.b16 %v631, %v630
      %648 = vmatprep.subr.bf16.mxu0 0
      %649 = vmatpush1.bf16.msra.mxu0 %v639
      %650 = vmatprep.subr.bf16.mxu0 0
      %651 = vmatpush1.bf16.msra.mxu0 %v638
      %652 = vmatprep.subr.bf16.mxu0 0
      %653 = vmatpush1.bf16.msra.mxu0 %v637
      %654 = vmatprep.subr.bf16.mxu0 0
      %655 = vmatpush1.bf16.msra.mxu0 %v636
      %656 = vmatprep.subr.bf16.mxu0 0
      %657 = vmatpush1.bf16.msra.mxu0 %v635
      %658 = vmatprep.subr.bf16.mxu0 0
      %659 = vmatpush1.bf16.msra.mxu0 %v634
      %660 = vmatprep.subr.bf16.mxu0 0
      %661 = vmatpush1.bf16.msra.mxu0 %v633
      %662 = vmatprep.subr.bf16.mxu0 0
      %663 = vmatpush1.bf16.msra.mxu0 %v632
      %664 = vmatprep.subr.bf16.mxu0 0
      %665 = vmatpush2.bf16.msra.mxu0 0
      %666 = vmatprep.subr.bf16.mxu0 0
      %667 = vmatpush2.bf16.msra.mxu0 0
      %668 = vmatprep.subr.bf16.mxu0 0
      %669 = vmatpush2.bf16.msra.mxu0 0
      %670 = vmatprep.subr.bf16.mxu0 0
      %671 = vmatpush2.bf16.msra.mxu0 0
      %672 = vmatprep.subr.bf16.mxu0 0
      %673 = vmatpush2.bf16.msra.mxu0 0
      %674 = vmatprep.subr.bf16.mxu0 0
      %675 = vmatpush2.bf16.msra.mxu0 0
      %676 = vmatprep.subr.bf16.mxu0 0
      %677 = vmatpush2.bf16.msra.mxu0 0
      %678 = vmatprep.subr.bf16.mxu0 0
      %679 = vmatpush2.bf16.msra.mxu0 0
      %680 = vmatprep.mubr.bf16.mxu0 0
      %681 = vmatmul.mubr.bf16.gmra.mxu0 %v567
      %v682 = vpop.f32.mrf.mxu0
      %v683 = vadd.f32 %v598, %v682
      %v684 = vpop.f32.mrf.mxu0
      %v685 = vpop.f32.mrf.mxu0
      %v686 = vadd.f32 %v598, %v685
      %v687 = vpop.f32.mrf.mxu0
      %688 = vmatprep.mubr.bf16.mxu0 0
      %689 = vmatmul.mubr.bf16.gmra.mxu0 %v568
      %v690 = vpop.f32.mrf.mxu0
      %v691 = vadd.f32 %v598, %v690
      %v692 = vpop.f32.mrf.mxu0
      %v693 = vpop.f32.mrf.mxu0
      %v694 = vadd.f32 %v598, %v693
      %v695 = vpop.f32.mrf.mxu0
      %696 = vmatprep.mubr.bf16.mxu0 0
      %697 = vmatmul.mubr.bf16.gmra.mxu0 %v569
      %v698 = vpop.f32.mrf.mxu0
      %v699 = vadd.f32 %v598, %v698
      %v700 = vpop.f32.mrf.mxu0
      %v701 = vpop.f32.mrf.mxu0
      %v702 = vadd.f32 %v598, %v701
      %v703 = vpop.f32.mrf.mxu0
      %704 = vmatprep.mubr.bf16.mxu0 0
      %705 = vmatmul.mubr.bf16.gmra.mxu0 %v570
      %v706 = vpop.f32.mrf.mxu0
      %v707 = vadd.f32 %v598, %v706
      %v708 = vpop.f32.mrf.mxu0
      %v709 = vpop.f32.mrf.mxu0
      %v710 = vadd.f32 %v598, %v709
      %v711 = vpop.f32.mrf.mxu0
      %712 = vmatprep.mubr.bf16.mxu0 0
      %713 = vmatmul.mubr.bf16.gmra.mxu0 %v571
      %v714 = vpop.f32.mrf.mxu0
      %v715 = vadd.f32 %v598, %v714
      %v716 = vpop.f32.mrf.mxu0
      %v717 = vpop.f32.mrf.mxu0
      %v718 = vadd.f32 %v598, %v717
      %v719 = vpop.f32.mrf.mxu0
      %720 = vmatprep.mubr.bf16.mxu0 0
      %721 = vmatmul.mubr.bf16.gmra.mxu0 %v572
      %v722 = vpop.f32.mrf.mxu0
      %v723 = vadd.f32 %v598, %v722
      %v724 = vpop.f32.mrf.mxu0
      %v725 = vpop.f32.mrf.mxu0
      %v726 = vadd.f32 %v598, %v725
      %v727 = vpop.f32.mrf.mxu0
      %728 = vmatprep.mubr.bf16.mxu0 0
      %729 = vmatmul.mubr.bf16.gmra.mxu0 %v573
      %v730 = vpop.f32.mrf.mxu0
      %v731 = vadd.f32 %v598, %v730
      %v732 = vpop.f32.mrf.mxu0
      %v733 = vpop.f32.mrf.mxu0
      %v734 = vadd.f32 %v598, %v733
      %v735 = vpop.f32.mrf.mxu0
      %736 = vmatprep.mubr.bf16.mxu0 0
      %737 = vmatmul.mubr.bf16.gmra.mxu0 %v574
      %v738 = vpop.f32.mrf.mxu0
      %v739 = vadd.f32 %v598, %v738
      %v740 = vpop.f32.mrf.mxu0
      %v741 = vpop.f32.mrf.mxu0
      %v742 = vadd.f32 %v598, %v741
      %v743 = vpop.f32.mrf.mxu0
      %744 = vmatprep.mubr.bf16.mxu0 0
      %745 = vmatmul.mubr.bf16.gmra.mxu0 %v575
      %v746 = vpop.f32.mrf.mxu0
      %v747 = vadd.f32 %v598, %v746
      %v748 = vpop.f32.mrf.mxu0
      %v749 = vpop.f32.mrf.mxu0
      %v750 = vadd.f32 %v598, %v749
      %v751 = vpop.f32.mrf.mxu0
      %752 = vmatprep.mubr.bf16.mxu0 0
      %753 = vmatmul.mubr.bf16.gmra.mxu0 %v576
      %v754 = vpop.f32.mrf.mxu0
      %v755 = vadd.f32 %v598, %v754
      %v756 = vpop.f32.mrf.mxu0
      %v757 = vpop.f32.mrf.mxu0
      %v758 = vpop.f32.mrf.mxu0
      %759 = vdwg.mxu0
      %v760 = vmax.f32 %v683, 0.0
      %v761 = vmax.f32 %v686, 0.0
      %v762 = vmax.f32 %v691, 0.0
      %v763 = vmax.f32 %v694, 0.0
      %v764 = vmax.f32 %v699, 0.0
      %v765 = vmax.f32 %v702, 0.0
      %v766 = vmax.f32 %v707, 0.0
      %v767 = vmax.f32 %v710, 0.0
      %v768 = vmax.f32 %v715, 0.0
      %v769 = vmax.f32 %v718, 0.0
      %v770 = vmax.f32 %v723, 0.0
      %v771 = vmax.f32 %v726, 0.0
      %v772 = vmax.f32 %v731, 0.0
      %v773 = vmax.f32 %v734, 0.0
      %v774 = vmax.f32 %v739, 0.0
      %v775 = vmax.f32 %v742, 0.0
      %v776 = vmax.f32 %v747, 0.0
      %v777 = vmax.f32 %v750, 0.0
      %v778 = vmax.f32 %v755, 0.0
      %v779 = vpack.c.bf16 %v761, %v760
      %v780 = vpack.c.bf16 %v763, %v762
      %v781 = vpack.c.bf16 %v765, %v764
      %v782 = vpack.c.bf16 %v767, %v766
      %v783 = vpack.c.bf16 %v769, %v768
      %v784 = vpack.c.bf16 %v771, %v770
      %v785 = vpack.c.bf16 %v773, %v772
      %v786 = vpack.c.bf16 %v775, %v774
      %v787 = vpack.c.bf16 %v777, %v776
      %v788 = vpack.c.bf16 %v778, %v778
      %v789 = vld [vmem:[%s5] sm:$0xf]
      %v790 = vld [vmem:[%s5 + $0x4] sm:$0xf]
      %v791 = vld [vmem:[%s5 + $0x8] sm:$0xf]
      %v792 = vld [vmem:[%s5 + $0xc] sm:$0xf]
      %v793 = vld [vmem:[%s5 + $0x10] sm:$0xf]
      %v794 = vld [vmem:[%s5 + $0x14] sm:$0xf]
      %v795 = vld [vmem:[%s5 + $0x18] sm:$0xf]
      %v796 = vld [vmem:[%s5 + $0x1c] sm:$0xf]
      %v797 = vld [vmem:[%s5 + $0x20] sm:$0xf]
      %v798 = vld [vmem:[%s5 + $0x24] sm:$0xf]
      %v799 = vld [vmem:[%s5 + $0x28] sm:$0xf]
      %v800 = vld [vmem:[%s5 + $0x2c] sm:$0xf]
      %v801 = vld [vmem:[%s5 + $0x30] sm:$0xf]
      %v802 = vld [vmem:[%s5 + $0x34] sm:$0xf]
      %v803 = vld [vmem:[%s5 + $0x38] sm:$0xf]
      %v804 = vld [vmem:[%s5 + $0x3c] sm:$0xf]
      %v805 = vld [vmem:[%s6] sm:$0x1]
      %v807 = vlaneseq
      %v808 = vshrl.u32 %v807, 7
      %v809 = vsub.s32 0, %v808
      %v810 = vrot.slane %v805, %v809
      %v828 = vunpack.c.l.b16 %v789
      %v829 = vunpack.c.l.b16 %v790
      %v830 = vunpack.c.l.b16 %v791
      %v831 = vunpack.c.l.b16 %v792
      %v832 = vunpack.c.l.b16 %v793
      %v833 = vunpack.c.l.b16 %v794
      %v834 = vunpack.c.l.b16 %v795
      %v835 = vunpack.c.l.b16 %v796
      %v836 = vunpack.c.l.b16 %v797
      %v837 = vunpack.c.l.b16 %v798
      %v838 = vunpack.c.l.b16 %v799
      %v839 = vunpack.c.l.b16 %v800
      %v840 = vunpack.c.l.b16 %v801
      %v841 = vunpack.c.l.b16 %v802
      %v842 = vunpack.c.l.b16 %v803
      %v843 = vunpack.c.l.b16 %v804
      %v844 = vpack.c.b16 %v829, %v828
      %v845 = vpack.c.b16 %v831, %v830
      %v846 = vpack.c.b16 %v833, %v832
      %v847 = vpack.c.b16 %v835, %v834
      %v848 = vpack.c.b16 %v837, %v836
      %v849 = vpack.c.b16 %v839, %v838
      %v850 = vpack.c.b16 %v841, %v840
      %v851 = vpack.c.b16 %v843, %v842
      %860 = vmatprep.subr.bf16.mxu0 0
      %861 = vmatpush1.bf16.msra.mxu0 %v851
      %862 = vmatprep.subr.bf16.mxu0 0
      %863 = vmatpush1.bf16.msra.mxu0 %v850
      %864 = vmatprep.subr.bf16.mxu0 0
      %865 = vmatpush1.bf16.msra.mxu0 %v849
      %866 = vmatprep.subr.bf16.mxu0 0
      %867 = vmatpush1.bf16.msra.mxu0 %v848
      %868 = vmatprep.subr.bf16.mxu0 0
      %869 = vmatpush1.bf16.msra.mxu0 %v847
      %870 = vmatprep.subr.bf16.mxu0 0
      %871 = vmatpush1.bf16.msra.mxu0 %v846
      %872 = vmatprep.subr.bf16.mxu0 0
      %873 = vmatpush1.bf16.msra.mxu0 %v845
      %874 = vmatprep.subr.bf16.mxu0 0
      %875 = vmatpush1.bf16.msra.mxu0 %v844
      %876 = vmatprep.subr.bf16.mxu0 0
      %877 = vmatpush2.bf16.msra.mxu0 0
      %878 = vmatprep.subr.bf16.mxu0 0
      %879 = vmatpush2.bf16.msra.mxu0 0
      %880 = vmatprep.subr.bf16.mxu0 0
      %881 = vmatpush2.bf16.msra.mxu0 0
      %882 = vmatprep.subr.bf16.mxu0 0
      %883 = vmatpush2.bf16.msra.mxu0 0
      %884 = vmatprep.subr.bf16.mxu0 0
      %885 = vmatpush2.bf16.msra.mxu0 0
      %886 = vmatprep.subr.bf16.mxu0 0
      %887 = vmatpush2.bf16.msra.mxu0 0
      %888 = vmatprep.subr.bf16.mxu0 0
      %889 = vmatpush2.bf16.msra.mxu0 0
      %890 = vmatprep.subr.bf16.mxu0 0
      %891 = vmatpush2.bf16.msra.mxu0 0
      %892 = vmatprep.mubr.bf16.mxu0 0
      %893 = vmatmul.mubr.bf16.gmra.mxu0 %v779
      %v894 = vpop.f32.mrf.mxu0
      %v895 = vadd.f32 %v810, %v894
      %v896 = vpop.f32.mrf.mxu0
      %v897 = vpop.f32.mrf.mxu0
      %v898 = vadd.f32 %v810, %v897
      %v899 = vpop.f32.mrf.mxu0
      %900 = vmatprep.mubr.bf16.mxu0 0
      %901 = vmatmul.mubr.bf16.gmra.mxu0 %v780
      %v902 = vpop.f32.mrf.mxu0
      %v903 = vadd.f32 %v810, %v902
      %v904 = vpop.f32.mrf.mxu0
      %v905 = vpop.f32.mrf.mxu0
      %v906 = vadd.f32 %v810, %v905
      %v907 = vpop.f32.mrf.mxu0
      %908 = vmatprep.mubr.bf16.mxu0 0
      %909 = vmatmul.mubr.bf16.gmra.mxu0 %v781
      %v910 = vpop.f32.mrf.mxu0
      %v911 = vadd.f32 %v810, %v910
      %v912 = vpop.f32.mrf.mxu0
      %v913 = vpop.f32.mrf.mxu0
      %v914 = vadd.f32 %v810, %v913
      %v915 = vpop.f32.mrf.mxu0
      %916 = vmatprep.mubr.bf16.mxu0 0
      %917 = vmatmul.mubr.bf16.gmra.mxu0 %v782
      %v918 = vpop.f32.mrf.mxu0
      %v919 = vadd.f32 %v810, %v918
      %v920 = vpop.f32.mrf.mxu0
      %v921 = vpop.f32.mrf.mxu0
      %v922 = vadd.f32 %v810, %v921
      %v923 = vpop.f32.mrf.mxu0
      %924 = vmatprep.mubr.bf16.mxu0 0
      %925 = vmatmul.mubr.bf16.gmra.mxu0 %v783
      %v926 = vpop.f32.mrf.mxu0
      %v927 = vadd.f32 %v810, %v926
      %v928 = vpop.f32.mrf.mxu0
      %v929 = vpop.f32.mrf.mxu0
      %v930 = vadd.f32 %v810, %v929
      %v931 = vpop.f32.mrf.mxu0
      %932 = vmatprep.mubr.bf16.mxu0 0
      %933 = vmatmul.mubr.bf16.gmra.mxu0 %v784
      %v934 = vpop.f32.mrf.mxu0
      %v935 = vadd.f32 %v810, %v934
      %v936 = vpop.f32.mrf.mxu0
      %v937 = vpop.f32.mrf.mxu0
      %v938 = vadd.f32 %v810, %v937
      %v939 = vpop.f32.mrf.mxu0
      %940 = vmatprep.mubr.bf16.mxu0 0
      %941 = vmatmul.mubr.bf16.gmra.mxu0 %v785
      %v942 = vpop.f32.mrf.mxu0
      %v943 = vadd.f32 %v810, %v942
      %v944 = vpop.f32.mrf.mxu0
      %v945 = vpop.f32.mrf.mxu0
      %v946 = vadd.f32 %v810, %v945
      %v947 = vpop.f32.mrf.mxu0
      %948 = vmatprep.mubr.bf16.mxu0 0
      %949 = vmatmul.mubr.bf16.gmra.mxu0 %v786
      %v950 = vpop.f32.mrf.mxu0
      %v951 = vadd.f32 %v810, %v950
      %v952 = vpop.f32.mrf.mxu0
      %v953 = vpop.f32.mrf.mxu0
      %v954 = vadd.f32 %v810, %v953
      %v955 = vpop.f32.mrf.mxu0
      %956 = vmatprep.mubr.bf16.mxu0 0
      %957 = vmatmul.mubr.bf16.gmra.mxu0 %v787
      %v958 = vpop.f32.mrf.mxu0
      %v959 = vadd.f32 %v810, %v958
      %v960 = vpop.f32.mrf.mxu0
      %v961 = vpop.f32.mrf.mxu0
      %v962 = vadd.f32 %v810, %v961
      %v963 = vpop.f32.mrf.mxu0
      %964 = vmatprep.mubr.bf16.mxu0 0
      %965 = vmatmul.mubr.bf16.gmra.mxu0 %v788
      %v966 = vpop.f32.mrf.mxu0
      %v967 = vadd.f32 %v810, %v966
      %v968 = vpop.f32.mrf.mxu0
      %v969 = vpop.f32.mrf.mxu0
      %v970 = vpop.f32.mrf.mxu0
      %971 = vdwg.mxu0
      %v972 = vpack.c.bf16 %v898, %v895
      %v973 = vpack.c.bf16 %v906, %v903
      %v974 = vpack.c.bf16 %v914, %v911
      %v975 = vpack.c.bf16 %v922, %v919
      %v976 = vpack.c.bf16 %v930, %v927
      %v977 = vpack.c.bf16 %v938, %v935
      %v978 = vpack.c.bf16 %v946, %v943
      %v979 = vpack.c.bf16 %v954, %v951
      %v980 = vpack.c.bf16 %v962, %v959
      %v981 = vpack.c.bf16 %v967, %v967
      %v992 = vunpack.c.l.b16 %v972
      %v993 = vunpack.c.h.b16 %v972
      %v994 = vunpack.c.l.b16 %v973
      %v995 = vunpack.c.h.b16 %v973
      %v996 = vunpack.c.l.b16 %v974
      %v997 = vunpack.c.h.b16 %v974
      %v998 = vunpack.c.l.b16 %v975
      %v999 = vunpack.c.h.b16 %v975
      %v1000 = vunpack.c.l.b16 %v976
      %v1001 = vunpack.c.h.b16 %v976
      %v1002 = vunpack.c.l.b16 %v977
      %v1003 = vunpack.c.h.b16 %v977
      %v1004 = vunpack.c.l.b16 %v978
      %v1005 = vunpack.c.h.b16 %v978
      %v1006 = vunpack.c.l.b16 %v979
      %v1007 = vunpack.c.h.b16 %v979
      %v1008 = vunpack.c.l.b16 %v980
      %v1009 = vunpack.c.h.b16 %v980
      %v1010 = vunpack.c.l.b16 %v981
      %v1011 = vpack.c.b16 %v992, %v992
      %v1012 = vpack.c.b16 %v993, %v993
      %v1013 = vpack.c.b16 %v994, %v994
      %v1014 = vpack.c.b16 %v995, %v995
      %v1015 = vpack.c.b16 %v996, %v996
      %v1016 = vpack.c.b16 %v997, %v997
      %v1017 = vpack.c.b16 %v998, %v998
      %v1018 = vpack.c.b16 %v999, %v999
      %v1019 = vpack.c.b16 %v1000, %v1000
      %v1020 = vpack.c.b16 %v1001, %v1001
      %v1021 = vpack.c.b16 %v1002, %v1002
      %v1022 = vpack.c.b16 %v1003, %v1003
      %v1023 = vpack.c.b16 %v1004, %v1004
      %v1024 = vpack.c.b16 %v1005, %v1005
      %v1025 = vpack.c.b16 %v1006, %v1006
      %v1026 = vpack.c.b16 %v1007, %v1007
      %v1027 = vpack.c.b16 %v1008, %v1008
      %v1028 = vpack.c.b16 %v1009, %v1009
      %v1029 = vpack.c.b16 %v1010, %v1010
      %vm1049 = vcmask 257024
      %1050 = vst.msk [vmem:[%s280] sm:$0xf] %vm1049, %v1011
      %1051 = vst.msk [vmem:[%s280 + $0x4] sm:$0xf] %vm1049, %v1012
      %1052 = vst.msk [vmem:[%s280 + $0x8] sm:$0xf] %vm1049, %v1013
      %1053 = vst.msk [vmem:[%s280 + $0xc] sm:$0xf] %vm1049, %v1014
      %1054 = vst.msk [vmem:[%s280 + $0x10] sm:$0xf] %vm1049, %v1015
      %1055 = vst.msk [vmem:[%s280 + $0x14] sm:$0xf] %vm1049, %v1016
      %1056 = vst.msk [vmem:[%s280 + $0x18] sm:$0xf] %vm1049, %v1017
      %1057 = vst.msk [vmem:[%s280 + $0x1c] sm:$0xf] %vm1049, %v1018
      %1058 = vst.msk [vmem:[%s280 + $0x20] sm:$0xf] %vm1049, %v1019
      %1059 = vst.msk [vmem:[%s280 + $0x24] sm:$0xf] %vm1049, %v1020
      %1060 = vst.msk [vmem:[%s280 + $0x28] sm:$0xf] %vm1049, %v1021
      %1061 = vst.msk [vmem:[%s280 + $0x2c] sm:$0xf] %vm1049, %v1022
      %1062 = vst.msk [vmem:[%s280 + $0x30] sm:$0xf] %vm1049, %v1023
      %1063 = vst.msk [vmem:[%s280 + $0x34] sm:$0xf] %vm1049, %v1024
      %1064 = vst.msk [vmem:[%s280 + $0x38] sm:$0xf] %vm1049, %v1025
      %1065 = vst.msk [vmem:[%s280 + $0x3c] sm:$0xf] %vm1049, %v1026
      %1066 = vst.msk [vmem:[%s280 + $0x40] sm:$0xf] %vm1049, %v1027
      %1067 = vst.msk [vmem:[%s280 + $0x44] sm:$0xf] %vm1049, %v1028
      %1068 = vst.msk [vmem:[%s280 + $0x48] sm:$0xf] %vm1049, %v1029
      %s1069 = smul.u32 19, %s18
      %p1070 = scmp.lt.s32.totalorder %s1069, 37
      %s1071 = scalar_select %p1070, %s1069, 37
      %s1072 = smul.addr %s1071, 4
      %s1073 = scalar_lea.vmem %s7, %s1072
      // Predicated region
      $region49: #{tpu_custom_call.1} parent=47 // pred_check
        %p1074 = pneg %p188
      $region50: #{tpu_custom_call.1} parent=47 // pred_check_branch
        %1076 = sbr.rel (%p1074) target = $region52
      $region51: #{tpu_custom_call.1} parent=47 // pred_region
        %s1077 = smul.u32 19, %s18
      $region52: #{tpu_custom_call.1} parent=47 // pred_fallthru
        _
    $region48: #{tpu_custom_call.1} parent=5 // pred_fallthru
      _
    %p1078 = scmp.le.s32.totalorder 2, %s13
    // Predicated region
    $region53: #{tpu_custom_call.1} parent=5 // pred_check
      %p1079 = pneg %p1078
    $region54: #{tpu_custom_call.1} parent=5 // pred_check_branch
      %1081 = sbr.rel (%p1079) target = $region56
    $region55: #{tpu_custom_call.1} parent=5 // pred_region
      %s1082 = ssub.s32 %s13, 2
      // Predicated region
      $region57: #{tpu_custom_call.1} parent=55 // pred_check
        %p1083 = pneg %p194
      $region58: #{tpu_custom_call.1} parent=55 // pred_check_branch
        %1085 = sbr.rel (%p1083) target = $region60
      $region59: #{tpu_custom_call.1} parent=55 // pred_region
        %s1086 = smul.u32 19, %s19
        %p1087 = scmp.lt.s32.totalorder %s1086, 37
        %s1088 = scalar_select %p1087, %s1086, 37
        %s1089 = smul.addr %s1088, 4
        %s1090 = scalar_lea.vmem %s7, %s1089
      $region60: #{tpu_custom_call.1} parent=55 // pred_fallthru
        _
    $region56: #{tpu_custom_call.1} parent=5 // pred_fallthru
      _
  $region6: #{tpu_custom_call.1} parent=0 // loop_footer
    %s17 = sadd.s32 1, %s13
  $region7: #{tpu_custom_call.1} parent=0 // loop_footer_branch
    %12 = sbr.rel target = $region3
  $region8: #{tpu_custom_call.1} parent=0 // loop_exit
    _

</llo_original>
